<compile_context>
chip_gen: v5e
topology: v5e:2x2
jax: 0.10.0
libtpu: 0.0.40
codegen_flags: <defaults>
</compile_context>

<pallas_src>
import jax
import jax.numpy as jnp
from jax import lax
from jax.experimental import pallas as pl
from jax.experimental.pallas import tpu as pltpu

_TARGET_BLOCK_BYTES = 8 << 20   # ~8 MiB input block (double-buffered by Pallas)
_VMEM_LIMIT_BYTES = 48 << 20    # > v5e's 16 MiB default, < v7x's 64 MiB physical


def _num_core_splits():
    """2 on dual-TensorCore chips (v7x); 1 on single-TC v5e/v6e."""
    try:
        kind = jax.devices()[0].device_kind.lower()
    except Exception:
        return 1
    return 2 if ("v7" in kind or "7x" in kind) else 1


def _make_tv_kernel(bc, p, blocks_per_split, h, w):
    def kernel(x_ref, acc_h_ref, acc_w_ref):
        # x_ref:               (p, h, w)  block of image planes (input dtype)
        # acc_h_ref/acc_w_ref: (1, h, w)  f32 accumulators, resident across i
        s = pl.program_id(0)
        i = pl.program_id(1)

        @pl.when(i == 0)
        def _init():
            acc_h_ref[...] = jnp.zeros_like(acc_h_ref)
            acc_w_ref[...] = jnp.zeros_like(acc_w_ref)

        # Logical (unclamped) block number -> number of real planes in it.
        blk = s * blocks_per_split + i
        n_valid = jnp.clip(bc - blk * p, 0, p)

        def body(pi, carry):
            xp = x_ref[pi].astype(jnp.float32)              # (h, w)
            # roll by (size-1) == roll by -1: neighbour view with exactly one
            # wrapped-around row/col.  Keeps everything lane/sublane dense so
            # the accumulator updates are full-tile, unmasked stores.
            dh = pltpu.roll(xp, h - 1, 0) - xp              # (h, w)
            dw = pltpu.roll(xp, w - 1, 1) - xp              # (h, w)
            acc_h_ref[0] += dh * dh
            acc_w_ref[0] += dw * dw
            # Cancel the wrap term (x[0,:]-x[h-1,:]) / (x[:,0]-x[:,w-1]) once;
            # the accumulated total is then exact no matter which row/col the
            # wrap landed in.
            wh = xp[0:1, :] - xp[h - 1:h, :]                # (1, w)
            ww = xp[:, 0:1] - xp[:, w - 1:w]                # (h, 1)
            acc_h_ref[0, 0:1, :] -= wh * wh
            acc_w_ref[0, :, 0:1] -= ww * ww
            return carry

        # Dynamic trip count: tail blocks never touch unspecified padding data.
        lax.fori_loop(0, n_valid, body, 0)

    return kernel


def tv_loss(x, tv_loss_weight=1.0):
    """Pallas implementation of TVLoss.forward for NCHW input x."""
    b, c, h, w = x.shape
    bc = b * c
    x_flat = x.reshape(bc, h, w)                  # free reshape, no copy / pad

    n_splits = _num_core_splits()

    # --- block sizing: split planes across cores first, then pick the largest
    # block such that 2x (double-buffered) input + accumulators fit in VMEM ---
    itemsize = x_flat.dtype.itemsize
    plane_bytes = h * w * itemsize
    acc_bytes = 2 * h * w * 4                     # two full-plane f32 accumulators
    tmp_bytes = 6 * h * w * 4                     # per-plane temporaries headroom
    budget = max(_VMEM_LIMIT_BYTES - acc_bytes - tmp_bytes, plane_bytes)
    p_target = max(_TARGET_BLOCK_BYTES // plane_bytes, 1)
    p_budget = max(budget // (2 * plane_bytes), 1)
    p = max(1, min(pl.cdiv(bc, n_splits), p_target, p_budget))
    # TODO(synk): planes so large that H*W*4 approaches VMEM would need
    # H-tiling with a 1-row halo; not needed for typical image sizes.

    total_blocks = pl.cdiv(bc, p)
    blocks_per_split = pl.cdiv(total_blocks, n_splits)

    def x_index_map(s, i):
        # Clamp so padding (s, i) steps re-read the last real block; their
        # in-kernel valid-plane count is 0, so they do no work.
        return (jnp.minimum(s * blocks_per_split + i, total_blocks - 1), 0, 0)

    n_elems = bc * h * w
    cost = pl.CostEstimate(
        flops=6 * n_elems,
        transcendentals=0,
        bytes_accessed=n_elems * itemsize + n_splits * acc_bytes,
    )

    if n_splits > 1 and hasattr(pltpu, "CORE_PARALLEL"):
        dim_sems = (pltpu.CORE_PARALLEL, pltpu.ARBITRARY)   # explicit 2-TC split (v7x)
    elif n_splits > 1:
        dim_sems = ("parallel", "arbitrary")
    else:
        dim_sems = ("arbitrary", "arbitrary")

    acc_h, acc_w = pl.pallas_call(
        _make_tv_kernel(bc, p, blocks_per_split, h, w),
        out_shape=(
            jax.ShapeDtypeStruct((n_splits, h, w), jnp.float32),
            jax.ShapeDtypeStruct((n_splits, h, w), jnp.float32),
        ),
        grid_spec=pltpu.PrefetchScalarGridSpec(
            num_scalar_prefetch=0,
            grid=(n_splits, blocks_per_split),
            in_specs=[pl.BlockSpec((p, h, w), x_index_map)],
            out_specs=(
                pl.BlockSpec((1, h, w), lambda s, i: (s, 0, 0)),
                pl.BlockSpec((1, h, w), lambda s, i: (s, 0, 0)),
            ),
        ),
        compiler_params=pltpu.CompilerParams(
            dimension_semantics=dim_sems,
            vmem_limit_bytes=_VMEM_LIMIT_BYTES,
        ),
        cost_estimate=cost,
    )(x_flat)

    # Final (tiny) cross-lane reduction + normalization in plain JAX.
    h_tv = jnp.sum(acc_h)
    w_tv = jnp.sum(acc_w)
    count_h = c * (h - 1) * w
    count_w = c * h * (w - 1)
    return tv_loss_weight * 2.0 * (h_tv / count_h + w_tv / count_w) / b


def _tv_loss_ref(x, tv_loss_weight=1.0):
    b, c, h, w = x.shape
    count_h = c * (h - 1) * w
    count_w = c * h * (w - 1)
    h_tv = jnp.sum((x[:, :, 1:, :] - x[:, :, :-1, :]) ** 2)
    w_tv = jnp.sum((x[:, :, :, 1:] - x[:, :, :, :-1]) ** 2)
    return tv_loss_weight * 2.0 * (h_tv / count_h + w_tv / count_w) / b


if __name__ == "__main__":
    key = jax.random.PRNGKey(0)
    x = jax.random.normal(key, (2, 4, 16, 16), dtype=jnp.float32)

    out = jax.block_until_ready(tv_loss(x, tv_loss_weight=1.0))
    ref = jax.block_until_ready(_tv_loss_ref(x, tv_loss_weight=1.0))

    assert jnp.allclose(out, ref, rtol=1e-5, atol=1e-5), (out, ref)
    print("KERNEL_OK")
</pallas_src>

<mosaic_0001>
module attributes {stable_mosaic.version = 11 : i64} {
  func.func @kernel(%arg0: i32, %arg1: i32, %arg2: memref<8x16x16xf32, #tpu.memory_space<vmem>>, %arg3: memref<1x16x16xf32, #tpu.memory_space<vmem>>, %arg4: memref<1x16x16xf32, #tpu.memory_space<vmem>>) attributes {dimension_semantics = [#tpu.dimension_semantics<arbitrary>, #tpu.dimension_semantics<arbitrary>], iteration_bounds = array<i64: 1, 1>, scalar_prefetch = 0 : i64, scratch_operands = 0 : i64, tpu.core_type = #tpu.core_type<tc>, window_params = [{transform_indices = @transform_0, window_bounds = array<i64: 8, 16, 16>}, {transform_indices = @transform_1, window_bounds = array<i64: 1, 16, 16>}, {transform_indices = @transform_2, window_bounds = array<i64: 1, 16, 16>}]} {
    %c0_i32 = arith.constant 0 : i32
    %0 = arith.cmpi eq, %arg1, %c0_i32 : i32
    %1 = arith.extui %0 : i1 to i32
    %c0_i32_0 = arith.constant 0 : i32
    %2 = arith.cmpi ne, %1, %c0_i32_0 : i32
    scf.if %2 {
      %cst = arith.constant 0.000000e+00 : f32
      %11 = vector.broadcast %cst : f32 to vector<1x16x16xf32>
      %c0 = arith.constant 0 : index
      %c0_7 = arith.constant 0 : index
      %c0_8 = arith.constant 0 : index
      %12 = vector.load %arg3[%c0, %c0_7, %c0_8] : memref<1x16x16xf32, #tpu.memory_space<vmem>>, vector<1x16x16xf32>
      tpu.vector_store %arg3[%c0, %c0_7, %c0_8], %11 {strides = array<i32>} : memref<1x16x16xf32, #tpu.memory_space<vmem>>, vector<1x16x16xf32>,
      %cst_9 = arith.constant 0.000000e+00 : f32
      %13 = vector.broadcast %cst_9 : f32 to vector<1x16x16xf32>
      %c0_10 = arith.constant 0 : index
      %c0_11 = arith.constant 0 : index
      %c0_12 = arith.constant 0 : index
      %14 = vector.load %arg4[%c0_10, %c0_11, %c0_12] : memref<1x16x16xf32, #tpu.memory_space<vmem>>, vector<1x16x16xf32>
      tpu.vector_store %arg4[%c0_10, %c0_11, %c0_12], %13 {strides = array<i32>} : memref<1x16x16xf32, #tpu.memory_space<vmem>>, vector<1x16x16xf32>,
    } else {
    }
    %c1_i32 = arith.constant 1 : i32
    %3 = arith.muli %arg0, %c1_i32 : i32
    %4 = arith.addi %3, %arg1 : i32
    %c8_i32 = arith.constant 8 : i32
    %5 = arith.muli %4, %c8_i32 : i32
    %c8_i32_1 = arith.constant 8 : i32
    %6 = arith.subi %c8_i32_1, %5 : i32
    %c0_i32_2 = arith.constant 0 : i32
    %c8_i32_3 = arith.constant 8 : i32
    %7 = arith.maxsi %c0_i32_2, %6 : i32
    %8 = arith.minsi %c8_i32_3, %7 : i32
    %c0_i32_4 = arith.constant 0 : i32
    %c0_i32_5 = arith.constant 0 : i32
    %9 = arith.subi %8, %c0_i32_5 : i32
    %10 = arith.addi %c0_i32_5, %9 : i32
    %c1_i32_6 = arith.constant 1 : i32
    scf.for %arg5 = %c0_i32_5 to %10 step %c1_i32_6  : i32 {
      %11 = arith.index_cast %arg5 : i32 to index
      %c0 = arith.constant 0 : index
      %c0_7 = arith.constant 0 : index
      %12 = vector.load %arg2[%11, %c0, %c0_7] : memref<8x16x16xf32, #tpu.memory_space<vmem>>, vector<1x16x16xf32>
      %13 = vector.shape_cast %12 : vector<1x16x16xf32> to vector<16x16xf32>
      %c15_i32 = arith.constant 15 : i32
      %14 = tpu.dynamic_rotate %13 by %c15_i32 dim 0 : vector<16x16xf32>, i32 -> vector<16x16xf32>
      %15 = arith.subf %14, %13 : vector<16x16xf32>
      %c15_i32_8 = arith.constant 15 : i32
      %16 = tpu.dynamic_rotate %13 by %c15_i32_8 dim 1 : vector<16x16xf32>, i32 -> vector<16x16xf32>
      %17 = arith.subf %16, %13 : vector<16x16xf32>
      %c0_9 = arith.constant 0 : index
      %c0_10 = arith.constant 0 : index
      %c0_11 = arith.constant 0 : index
      %18 = vector.load %arg3[%c0_9, %c0_10, %c0_11] : memref<1x16x16xf32, #tpu.memory_space<vmem>>, vector<1x16x16xf32>
      %19 = vector.shape_cast %18 : vector<1x16x16xf32> to vector<16x16xf32>
      %20 = arith.mulf %15, %15 : vector<16x16xf32>
      %21 = arith.addf %19, %20 : vector<16x16xf32>
      %c0_12 = arith.constant 0 : index
      %c0_13 = arith.constant 0 : index
      %c0_14 = arith.constant 0 : index
      %22 = vector.load %arg3[%c0_12, %c0_13, %c0_14] : memref<1x16x16xf32, #tpu.memory_space<vmem>>, vector<1x16x16xf32>
      %23 = vector.shape_cast %22 : vector<1x16x16xf32> to vector<16x16xf32>
      %24 = vector.shape_cast %21 : vector<16x16xf32> to vector<1x16x16xf32>
      tpu.vector_store %arg3[%c0_12, %c0_13, %c0_14], %24 {strides = array<i32>} : memref<1x16x16xf32, #tpu.memory_space<vmem>>, vector<1x16x16xf32>,
      %c0_15 = arith.constant 0 : index
      %c0_16 = arith.constant 0 : index
      %c0_17 = arith.constant 0 : index
      %25 = vector.load %arg4[%c0_15, %c0_16, %c0_17] : memref<1x16x16xf32, #tpu.memory_space<vmem>>, vector<1x16x16xf32>
      %26 = vector.shape_cast %25 : vector<1x16x16xf32> to vector<16x16xf32>
      %27 = arith.mulf %17, %17 : vector<16x16xf32>
      %28 = arith.addf %26, %27 : vector<16x16xf32>
      %c0_18 = arith.constant 0 : index
      %c0_19 = arith.constant 0 : index
      %c0_20 = arith.constant 0 : index
      %29 = vector.load %arg4[%c0_18, %c0_19, %c0_20] : memref<1x16x16xf32, #tpu.memory_space<vmem>>, vector<1x16x16xf32>
      %30 = vector.shape_cast %29 : vector<1x16x16xf32> to vector<16x16xf32>
      %31 = vector.shape_cast %28 : vector<16x16xf32> to vector<1x16x16xf32>
      tpu.vector_store %arg4[%c0_18, %c0_19, %c0_20], %31 {strides = array<i32>} : memref<1x16x16xf32, #tpu.memory_space<vmem>>, vector<1x16x16xf32>,
      %32 = vector.extract_strided_slice %13 {offsets = [0, 0], sizes = [1, 16], strides = [1, 1]} : vector<16x16xf32> to vector<1x16xf32>
      %33 = vector.extract_strided_slice %13 {offsets = [15, 0], sizes = [1, 16], strides = [1, 1]} : vector<16x16xf32> to vector<1x16xf32>
      %34 = arith.subf %32, %33 : vector<1x16xf32>
      %35 = vector.extract_strided_slice %13 {offsets = [0, 0], sizes = [16, 1], strides = [1, 1]} : vector<16x16xf32> to vector<16x1xf32>
      %36 = vector.extract_strided_slice %13 {offsets = [0, 15], sizes = [16, 1], strides = [1, 1]} : vector<16x16xf32> to vector<16x1xf32>
      %37 = arith.subf %35, %36 : vector<16x1xf32>
      %c0_21 = arith.constant 0 : index
      %c0_22 = arith.constant 0 : index
      %c0_23 = arith.constant 0 : index
      %38 = vector.load %arg3[%c0_21, %c0_22, %c0_23] : memref<1x16x16xf32, #tpu.memory_space<vmem>>, vector<1x1x16xf32>
      %39 = vector.shape_cast %38 : vector<1x1x16xf32> to vector<1x16xf32>
      %40 = arith.mulf %34, %34 : vector<1x16xf32>
      %41 = arith.subf %39, %40 : vector<1x16xf32>
      %c0_24 = arith.constant 0 : index
      %c0_25 = arith.constant 0 : index
      %c0_26 = arith.constant 0 : index
      %42 = vector.load %arg3[%c0_24, %c0_25, %c0_26] : memref<1x16x16xf32, #tpu.memory_space<vmem>>, vector<1x1x16xf32>
      %43 = vector.shape_cast %42 : vector<1x1x16xf32> to vector<1x16xf32>
      %44 = vector.shape_cast %41 : vector<1x16xf32> to vector<1x1x16xf32>
      tpu.vector_store %arg3[%c0_24, %c0_25, %c0_26], %44 {strides = array<i32>} : memref<1x16x16xf32, #tpu.memory_space<vmem>>, vector<1x1x16xf32>,
      %c0_27 = arith.constant 0 : index
      %c0_28 = arith.constant 0 : index
      %c0_29 = arith.constant 0 : index
      %45 = vector.load %arg4[%c0_27, %c0_28, %c0_29] : memref<1x16x16xf32, #tpu.memory_space<vmem>>, vector<1x16x1xf32>
      %46 = vector.shape_cast %45 : vector<1x16x1xf32> to vector<16x1xf32>
      %47 = arith.mulf %37, %37 : vector<16x1xf32>
      %48 = arith.subf %46, %47 : vector<16x1xf32>
      %c0_30 = arith.constant 0 : index
      %c0_31 = arith.constant 0 : index
      %c0_32 = arith.constant 0 : index
      %49 = vector.load %arg4[%c0_30, %c0_31, %c0_32] : memref<1x16x16xf32, #tpu.memory_space<vmem>>, vector<1x16x1xf32>
      %50 = vector.shape_cast %49 : vector<1x16x1xf32> to vector<16x1xf32>
      %51 = vector.shape_cast %48 : vector<16x1xf32> to vector<1x16x1xf32>
      tpu.vector_store %arg4[%c0_30, %c0_31, %c0_32], %51 {strides = array<i32>} : memref<1x16x16xf32, #tpu.memory_space<vmem>>, vector<1x16x1xf32>,
    }
    return
  }
  func.func @transform_0(%arg0: i32, %arg1: i32) -> (i32, i32, i32) {
    %c1_i32 = arith.constant 1 : i32
    %0 = arith.muli %arg0, %c1_i32 : i32
    %1 = arith.addi %0, %arg1 : i32
    %c0_i32 = arith.constant 0 : i32
    %2 = arith.minsi %1, %c0_i32 : i32
    %c0_i32_0 = arith.constant 0 : i32
    %c0_i32_1 = arith.constant 0 : i32
    %c0_i32_2 = arith.constant 0 : i32
    return %2, %c0_i32_0, %c0_i32_1 : i32, i32, i32
  }
  func.func @transform_1(%arg0: i32, %arg1: i32) -> (i32, i32, i32) {
    %c0_i32 = arith.constant 0 : i32
    %c0_i32_0 = arith.constant 0 : i32
    %c0_i32_1 = arith.constant 0 : i32
    return %arg0, %c0_i32, %c0_i32_0 : i32, i32, i32
  }
  func.func @transform_2(%arg0: i32, %arg1: i32) -> (i32, i32, i32) {
    %c0_i32 = arith.constant 0 : i32
    %c0_i32_0 = arith.constant 0 : i32
    %c0_i32_1 = arith.constant 0 : i32
    return %arg0, %c0_i32, %c0_i32_0 : i32, i32, i32
  }
}

</mosaic_0001>

<llo_original>
// kernel: tpu_custom_call.1
$region0: #{tpu_custom_call.1}
  #allocation0 [shape = 'u32[]', space=smem, size = 0x4, offset = 0x4, fixed_abs, tag = 'smem constant byte address 0x4 - core index']
  #allocation1 [shape = 'u32[72,128]{1,0:T(1,128)}', space=vmem, size = 0x9000, scoped, tag = 'internal scratch']
  %s0 = inlined_call_operand.hbm [shape: f32[8,16,16], index: 0, kind: input, shape index: {}]
  %s1 = inlined_call_operand.hbm [shape: f32[1,16,16], index: 1, kind: output, shape index: {0}]
  %s2 = inlined_call_operand.hbm [shape: f32[1,16,16], index: 2, kind: output, shape index: {1}]
  %3 = xla_tuple %s1, %s2
  %s4 = sld [smem:[#allocation0]]
  $region37: #{tpu_custom_call.1} parent=0
    _
  %s6 = ssub.s32 1, %s4
  %s7 = scalar_select 0, %s6, %s4
  $region1: #{tpu_custom_call.1} parent=0
    #allocation2 [shape = 'u8[65536]{0}', space=vmem, size = 0x10000, scoped, tag = 'input window, operand 0, single buffered']
    #allocation3 [shape = 's32[1]{0}', space=sflag, size = 0x4, scoped, tag = 'scoped memory for tpu_custom_call.1']
    #allocation4 [shape = 's32[1]{0}', space=sflag, size = 0x4, scoped, tag = 'scoped memory for tpu_custom_call.1']
    #allocation5 [shape = 'u8[8192]{0}', space=vmem, size = 0x2000, scoped, tag = 'output window, operand 0, single buffered']
    #allocation6 [shape = 'u8[8192]{0}', space=vmem, size = 0x2000, scoped, tag = 'output window, operand 1, single buffered']
    #allocation7 [shape = 's32[1]{0}', space=sflag, size = 0x4, scoped, tag = 'scoped memory for tpu_custom_call.1']
    %8 = vsyncpa [#allocation3], 0
    %9 = vsyncpa [#allocation4], 0
    %10 = vsyncpa [#allocation7], 0
    // Predicated region
    $region2: #{tpu_custom_call.1} parent=1 // pred_check
      _
    $region3: #{tpu_custom_call.1} parent=1 // pred_check_branch
      %12 = sbr.rel (0) target = $region5
    $region4: #{tpu_custom_call.1} parent=1 // pred_region
      %s13 = sadd.s32 0, 0
      %p14 = scmp.lt.s32.totalorder %s13, 0
      %s15 = scalar_select %p14, %s13, 0
      %s16 = smul.u32 8, %s15
      %18 = vsyncadd [#allocation3], 0
      %s19 = smul.addr %s16, 2
      %s20 = smul.addr %s19, 8
      %s21 = scalar_lea.hbm %s0, %s20
      %s22 = sshll.u32 %s21, 4
      %s23 = int_to_ptr.hbm [resolvable:$true] %s22
      %s24 = sshll.u32 [#allocation2], 4
      %s25 = int_to_ptr.vmem [resolvable:$true] %s24
      %30 = dma.hbm_to_vmem [thread:$0]  %s23, 2048, %s25, [#allocation3], 128, 128, 8
    $region5: #{tpu_custom_call.1} parent=1 // pred_fallthru
      _
    // Predicated region
    $region6: #{tpu_custom_call.1} parent=1 // pred_check
      _
    $region7: #{tpu_custom_call.1} parent=1 // pred_check_branch
      %32 = sbr.rel (0) target = $region9
    $region8: #{tpu_custom_call.1} parent=1 // pred_region
      %34 = dma.done [#allocation3], 2048
    $region9: #{tpu_custom_call.1} parent=1 // pred_fallthru
      _
    %s35 = sadd.s32 0, 0
    %p36 = scmp.lt.s32.totalorder %s35, 0
    %s37 = scalar_select %p36, %s35, 0
    %s38 = smul.u32 8, %s37
    %p39 = scmp.eq.s32.totalorder 0, 0
    // Predicated region
    $region10: #{tpu_custom_call.1} parent=1 // pred_check
      %p40 = pneg %p39
    $region11: #{tpu_custom_call.1} parent=1 // pred_check_branch
      %42 = sbr.rel (%p40) target = $region13
    $region12: #{tpu_custom_call.1} parent=1 // pred_region
      %vm43 = vcmask 130048
      %44 = vst.msk [vmem:[#allocation5] sm:$0xff] %vm43, 0.0
      %45 = vst.msk [vmem:[#allocation5 + $0x8] sm:$0xff] %vm43, 0.0
      %46 = vst.msk [vmem:[#allocation6] sm:$0xff] %vm43, 0.0
      %47 = vst.msk [vmem:[#allocation6 + $0x8] sm:$0xff] %vm43, 0.0
    $region13: #{tpu_custom_call.1} parent=1 // pred_fallthru
      _
    %s48 = sadd.s32 0, 0
    %s49 = smul.u32 %s48, 8
    %s50 = ssub.s32 8, %s49
    %p51 = scmp.gt.s32.totalorder %s50, 0
    %s52 = scalar_select %p51, %s50, 0
    %p53 = scmp.lt.s32.totalorder %s52, 8
    %s54 = scalar_select %p53, %s52, 8
    // While loop
    $region14: #{tpu_custom_call.1} parent=1 // loop_pre_header
      _
    $region15: #{tpu_custom_call.1} parent=1 // loop_header
      %s56 = sphi 0, %s58
      %p57 = scmp.ge.s32.totalorder %s56, %s54
    $region16: #{tpu_custom_call.1} parent=1 // loop_header_branch
      %60 = sbr.rel (%p57) target = $region20
    $region17: #{tpu_custom_call.1} parent=1 // loop_body
      %s61 = smul.u32 %s56, 16
      %s62 = scalar_lea.vmem [#allocation2], %s61
      %v63 = vld [vmem:[%s62] sm:$0xff]
      %v64 = vld [vmem:[%s62 + $0x8] sm:$0xff]
      %v65 = vrot.slane %v63, 1
      %v66 = vrot.slane %v64, 1
      %v67 = vlaneseq
      %v68 = vshrl.u32 %v67, 7
      %vm69 = vcmp.lt.s32.totalorder %v68, 7
      %v70 = vsel %vm69, %v65, %v66
      %v71 = vsel %vm69, %v66, %v65
      %v72 = vsub.f32 %v70, %v63
      %v73 = vsub.f32 %v71, %v64
      %vm74 = vcmask 1047680
      %75 = vrot.lane.b32.xlu0 %v63, 16
      %v76 = vpop.permute.xlu0 %75
      %v77 = vsel %vm74, %v76, %v63
      %78 = vrot.lane.b32.xlu0 %v64, 16
      %v79 = vpop.permute.xlu0 %78
      %v80 = vsel %vm74, %v79, %v64
      %81 = vrot.lane.b32.xlu0 %v77, 16
      %v82 = vpop.permute.xlu0 %81
      %83 = vrot.lane.b32.xlu0 %v80, 16
      %v84 = vpop.permute.xlu0 %83
      %v85 = vsel %vm74, %v82, %v63
      %v86 = vsel %vm74, %v84, %v64
      %89 = vrot.lane.b32.xlu0 %v63, 1
      %v90 = vpop.permute.xlu0 %89
      %91 = vrot.lane.b32.xlu0 %v64, 1
      %v92 = vpop.permute.xlu0 %91
      %v95 = vsub.f32 %v85, %v90
      %v96 = vsub.f32 %v86, %v92
      %v97 = vld [vmem:[#allocation5] sm:$0xff]
      %v98 = vld [vmem:[#allocation5 + $0x8] sm:$0xff]
      %v99 = vmul.f32 %v72, %v72
      %v100 = vmul.f32 %v73, %v73
      %v101 = vadd.f32 %v97, %v99
      %v102 = vadd.f32 %v98, %v100
      %vm103 = vcmask 130048
      %104 = vst.msk [vmem:[#allocation5] sm:$0xff] %vm103, %v101
      %105 = vst.msk [vmem:[#allocation5 + $0x8] sm:$0xff] %vm103, %v102
      %v106 = vld [vmem:[#allocation6] sm:$0xff]
      %v107 = vld [vmem:[#allocation6 + $0x8] sm:$0xff]
      %v108 = vmul.f32 %v95, %v95
      %v109 = vmul.f32 %v96, %v96
      %112 = vrot.lane.b32.xlu0 %v108, 127
      %v113 = vpop.permute.xlu0 %112
      %114 = vrot.lane.b32.xlu0 %v109, 127
      %v115 = vpop.permute.xlu0 %114
      %v118 = vadd.f32 %v106, %v113
      %v119 = vadd.f32 %v107, %v115
      %120 = vst.msk [vmem:[#allocation6] sm:$0xff] %vm103, %v118
      %121 = vst.msk [vmem:[#allocation6 + $0x8] sm:$0xff] %vm103, %v119
      %v122 = vrot.slane %v64, 7
      %v124 = vsub.f32 %v63, %v122
      %125 = vrot.lane.b32.xlu0 %v63, 113
      %v126 = vpop.permute.xlu0 %125
      %127 = vrot.lane.b32.xlu0 %v64, 113
      %v128 = vpop.permute.xlu0 %127
      %v131 = vsub.f32 %v63, %v126
      %v132 = vsub.f32 %v64, %v128
      %v133 = vld [vmem:[#allocation5] sm:$0x1]
      %v134 = vmul.f32 %v124, %v124
      %v135 = vsub.f32 %v133, %v134
      %vm136 = vcmask 122880
      %137 = vst.msk [vmem:[#allocation5] sm:$0x1] %vm136, %v135
      %v138 = vld [vmem:[#allocation6] sm:$0xff]
      %v139 = vld [vmem:[#allocation6 + $0x8] sm:$0xff]
      %v140 = vmul.f32 %v131, %v131
      %v141 = vmul.f32 %v132, %v132
      %v142 = vsub.f32 %v138, %v140
      %v143 = vsub.f32 %v139, %v141
      %vm144 = vcmask 7168
      %145 = vst.msk [vmem:[#allocation6] sm:$0xff] %vm144, %v142
      %146 = vst.msk [vmem:[#allocation6 + $0x8] sm:$0xff] %vm144, %v143
    $region18: #{tpu_custom_call.1} parent=1 // loop_footer
      %s58 = sadd.s32 %s56, 1
    $region19: #{tpu_custom_call.1} parent=1 // loop_footer_branch
      %55 = sbr.rel target = $region15
    $region20: #{tpu_custom_call.1} parent=1 // loop_exit
      _
    // Predicated region
    $region21: #{tpu_custom_call.1} parent=1 // pred_check
      _
    $region22: #{tpu_custom_call.1} parent=1 // pred_check_branch
      %148 = sbr.rel (0) target = $region24
    $region23: #{tpu_custom_call.1} parent=1 // pred_region
      %150 = vsyncadd [#allocation4], 0
      %s151 = sshll.u32 [#allocation5], 4
      %s152 = int_to_ptr.vmem [resolvable:$true] %s151
      %s153 = sshll.u32 %s1, 4
      %s154 = int_to_ptr.hbm [resolvable:$true] %s153
      %159 = dma.vmem_to_hbm [thread:$0]  %s152, 256, %s154, [#allocation4], 128, 128, 8
    $region24: #{tpu_custom_call.1} parent=1 // pred_fallthru
      _
    // Predicated region
    $region25: #{tpu_custom_call.1} parent=1 // pred_check
      _
    $region26: #{tpu_custom_call.1} parent=1 // pred_check_branch
      %161 = sbr.rel (0) target = $region28
    $region27: #{tpu_custom_call.1} parent=1 // pred_region
      %163 = vsyncadd [#allocation7], 0
      %s164 = sshll.u32 [#allocation6], 4
      %s165 = int_to_ptr.vmem [resolvable:$true] %s164
      %s166 = sshll.u32 %s2, 4
      %s167 = int_to_ptr.hbm [resolvable:$true] %s166
      %172 = dma.vmem_to_hbm [thread:$0]  %s165, 256, %s167, [#allocation7], 128, 128, 8
    $region28: #{tpu_custom_call.1} parent=1 // pred_fallthru
      _
    // Predicated region
    $region29: #{tpu_custom_call.1} parent=1 // pred_check
      _
    $region30: #{tpu_custom_call.1} parent=1 // pred_check_branch
      %174 = sbr.rel (0) target = $region32
    $region31: #{tpu_custom_call.1} parent=1 // pred_region
      %176 = dma.done [#allocation4], 256
    $region32: #{tpu_custom_call.1} parent=1 // pred_fallthru
      _
    // Predicated region
    $region33: #{tpu_custom_call.1} parent=1 // pred_check
      _
    $region34: #{tpu_custom_call.1} parent=1 // pred_check_branch
      %178 = sbr.rel (0) target = $region36
    $region35: #{tpu_custom_call.1} parent=1 // pred_region
      %180 = dma.done [#allocation7], 256
    $region36: #{tpu_custom_call.1} parent=1 // pred_fallthru
      _
    %181 = vsyncpa [#allocation3], 1
    %182 = vsyncpa [#allocation4], 1
    %183 = vsyncpa [#allocation7], 1

</llo_original>
